<compile_context>
chip_gen: v5e
topology: v5e:2x2
jax: 0.10.0
libtpu: 0.0.40
codegen_flags: <defaults>
</compile_context>

<pallas_src>
import functools

import jax
import jax.numpy as jnp
from jax.experimental import pallas as pl
from jax.experimental.pallas import tpu as pltpu


_ROW_TILE_BYTES = 4 * 1024 * 1024   # target per-step tile footprint (x + mask + out)
_MAX_ROWS = 2048                    # row-block cap
_VMEM_LIMIT_BYTES = 32 * 1024 * 1024  # safe on v5e/v6e (128 MiB phys) and v7x (64 MiB phys)


def _softmax_rows(x, fill_dtype, mask=None):
    """Numerically stable masked softmax over the last axis, f32 reductions."""
    xf = x.astype(jnp.float32)
    if mask is not None:
        fill = jnp.float32(jnp.finfo(fill_dtype).min)
        xf = jnp.where(mask, xf, fill)
    x_max = jnp.max(xf, axis=-1, keepdims=True)
    e = jnp.exp(xf - x_max)
    denom = jnp.sum(e, axis=-1, keepdims=True)
    # EUP approx reciprocal + one Newton refinement (keeps 1e-5 rtol vs exact divide).
    r = pl.reciprocal(denom, approx=True)
    r = r * (2.0 - denom * r)
    return e * r


def _masked_softmax_kernel(x_ref, m_ref, o_ref):
    # x_ref/m_ref/o_ref: (R, D) tiles in VMEM; mask True = keep.
    o_ref[...] = _softmax_rows(x_ref[...], x_ref.dtype, m_ref[...]).astype(o_ref.dtype)


def _plain_softmax_kernel(x_ref, o_ref):
    o_ref[...] = _softmax_rows(x_ref[...], x_ref.dtype).astype(o_ref.dtype)


def _choose_row_block(n_rows, bytes_per_row):
    """Largest row-block (multiple of 8, <= _MAX_ROWS) fitting the tile budget."""
    r = _ROW_TILE_BYTES // max(int(bytes_per_row), 1)
    r = int(min(_MAX_ROWS, max(8, r)))
    r = (r // 8) * 8
    if r >= n_rows:
        return n_rows  # full-extent block is always layout-legal
    return r


@functools.partial(jax.jit, static_argnames=("dim",))
def masked_softmax(inputs, mask=None, dim=-1):
    """Pallas TPU masked softmax.

    inputs: float array, any rank >= 1.
    mask:   bool array broadcastable to inputs (True = keep). If None, plain softmax.
    dim:    softmax axis (like torch's F.softmax dim).
    """
    ndim = inputs.ndim
    axis = dim % ndim

    x = inputs
    m = mask
    if m is not None:
        # TODO(synk): keep broadcast masks (e.g. [B, 1, D]) at their original shape
        # with their own BlockSpec/index_map to cut HBM mask traffic further.
        m = jnp.broadcast_to(m.astype(jnp.bool_), x.shape)

    # Glue: move the softmax axis to the last (lane) position.
    # TODO(synk): add an axis=-2 (sublane/XLU) kernel variant to avoid this extra
    # HBM transpose pass when dim == ndim - 2.
    moved = axis != ndim - 1
    if moved:
        x = jnp.moveaxis(x, axis, -1)
        if m is not None:
            m = jnp.moveaxis(m, axis, -1)

    t_shape = x.shape
    D = t_shape[-1]
    N = 1
    for s in t_shape[:-1]:
        N *= s
    x2 = x.reshape(N, D)
    m2 = m.reshape(N, D) if m is not None else None

    bytes_per_row = D * (2 * x2.dtype.itemsize + (1 if m2 is not None else 0))
    R = _choose_row_block(N, bytes_per_row)
    grid = (pl.cdiv(N, R),)

    row_spec = pl.BlockSpec((R, D), lambda i: (i, 0))
    cparams = pltpu.CompilerParams(
        dimension_semantics=("parallel",),
        vmem_limit_bytes=_VMEM_LIMIT_BYTES,
    )
    out_shape = jax.ShapeDtypeStruct((N, D), inputs.dtype)

    if m2 is None:
        out2 = pl.pallas_call(
            _plain_softmax_kernel,
            out_shape=out_shape,
            grid_spec=pltpu.PrefetchScalarGridSpec(
                num_scalar_prefetch=0,
                grid=grid,
                in_specs=[row_spec],
                out_specs=row_spec,
            ),
            compiler_params=cparams,
        )(x2)
    else:
        out2 = pl.pallas_call(
            _masked_softmax_kernel,
            out_shape=out_shape,
            grid_spec=pltpu.PrefetchScalarGridSpec(
                num_scalar_prefetch=0,
                grid=grid,
                in_specs=[row_spec, row_spec],
                out_specs=row_spec,
            ),
            compiler_params=cparams,
        )(x2, m2)

    out = out2.reshape(t_shape)
    if moved:
        out = jnp.moveaxis(out, -1, axis)
    return out


def _reference_masked_softmax(inputs, mask, dim):
    x = inputs
    if mask is not None:
        x = jnp.where(mask, x, jnp.finfo(inputs.dtype).min)
    return jax.nn.softmax(x, axis=dim)


if __name__ == "__main__":
    key = jax.random.PRNGKey(0)
    k1, k2, k3 = jax.random.split(key, 3)

    B, S, D = 2, 8, 128  # batch, seq, hidden
    x = jax.random.normal(k1, (B, S, D), dtype=jnp.float32)
    mask = jax.random.bernoulli(k2, p=0.7, shape=(B, S, D))

    # Masked case (dim=-1, matches MaskedSoftmax(dim=-1)).
    out = jax.block_until_ready(masked_softmax(x, mask, dim=-1))
    ref = _reference_masked_softmax(x, mask, -1)
    assert jnp.allclose(out, ref, atol=1e-5, rtol=1e-5), "masked softmax mismatch"

    # No-mask case (dedicated kernel, no mask traffic).
    out_nm = jax.block_until_ready(masked_softmax(x, None, dim=-1))
    ref_nm = jax.nn.softmax(x, axis=-1)
    assert jnp.allclose(out_nm, ref_nm, atol=1e-5, rtol=1e-5), "softmax mismatch"

    # Non-last softmax axis with a broadcast padding mask (exercises the glue path).
    mask_b = jax.random.bernoulli(k3, p=0.8, shape=(B, S, 1))
    out_d1 = jax.block_until_ready(masked_softmax(x, mask_b, dim=1))
    ref_d1 = _reference_masked_softmax(x, jnp.broadcast_to(mask_b, x.shape), 1)
    assert jnp.allclose(out_d1, ref_d1, atol=1e-5, rtol=1e-5), "dim=1 masked softmax mismatch"

    print("KERNEL_OK")
</pallas_src>

<mosaic_0001>
module attributes {stable_mosaic.version = 11 : i64} {
  func.func @_masked_softmax_kernel(%arg0: i32, %arg1: memref<16x128xf32, #tpu.memory_space<vmem>>, %arg2: memref<16x128xi32, #tpu.memory_space<vmem>>, %arg3: memref<16x128xf32, #tpu.memory_space<vmem>>) attributes {dimension_semantics = [#tpu.dimension_semantics<parallel>], iteration_bounds = array<i64: 1>, scalar_prefetch = 0 : i64, scratch_operands = 0 : i64, tpu.core_type = #tpu.core_type<tc>, window_params = [{transform_indices = @transform_0, window_bounds = array<i64: 16, 128>}, {transform_indices = @transform_1, window_bounds = array<i64: 16, 128>}, {transform_indices = @transform_2, window_bounds = array<i64: 16, 128>}]} {
    %c0 = arith.constant 0 : index
    %c0_0 = arith.constant 0 : index
    %0 = vector.load %arg1[%c0, %c0_0] : memref<16x128xf32, #tpu.memory_space<vmem>>, vector<16x128xf32>
    %c0_1 = arith.constant 0 : index
    %c0_2 = arith.constant 0 : index
    %1 = vector.load %arg2[%c0_1, %c0_2] : memref<16x128xi32, #tpu.memory_space<vmem>>, vector<16x128xi32>
    %cst = arith.constant dense<0> : vector<16x128xi32>
    %2 = arith.cmpi ne, %1, %cst : vector<16x128xi32>
    %cst_3 = arith.constant -3.40282347E+38 : f32
    %3 = vector.broadcast %cst_3 : f32 to vector<16x128xf32>
    %4 = arith.select %2, %0, %3 : vector<16x128xi1>, vector<16x128xf32>
    %cst_4 = arith.constant dense<0xFF800000> : vector<16xf32>
    %5 = vector.multi_reduction <maximumf>, %4, %cst_4 [1] : vector<16x128xf32> to vector<16xf32>
    %6 = vector.shape_cast %5 : vector<16xf32> to vector<16x1xf32>
    %7 = vector.broadcast %6 : vector<16x1xf32> to vector<16x128xf32>
    %8 = arith.subf %4, %7 : vector<16x128xf32>
    %9 = math.exp %8 : vector<16x128xf32>
    %cst_5 = arith.constant dense<0.000000e+00> : vector<16xf32>
    %10 = vector.multi_reduction <add>, %9, %cst_5 [1] : vector<16x128xf32> to vector<16xf32>
    %11 = vector.shape_cast %10 : vector<16xf32> to vector<16x1xf32>
    %12 = tpu.reciprocal %11 {approx = true} : vector<16x1xf32> -> vector<16x1xf32>
    %13 = arith.mulf %11, %12 : vector<16x1xf32>
    %cst_6 = arith.constant 2.000000e+00 : f32
    %14 = vector.broadcast %cst_6 : f32 to vector<16x1xf32>
    %15 = arith.subf %14, %13 : vector<16x1xf32>
    %16 = arith.mulf %12, %15 : vector<16x1xf32>
    %17 = vector.broadcast %16 : vector<16x1xf32> to vector<16x128xf32>
    %18 = arith.mulf %9, %17 : vector<16x128xf32>
    %c0_7 = arith.constant 0 : index
    %c0_8 = arith.constant 0 : index
    %19 = vector.load %arg3[%c0_7, %c0_8] : memref<16x128xf32, #tpu.memory_space<vmem>>, vector<16x128xf32>
    tpu.vector_store %arg3[%c0_7, %c0_8], %18 {strides = array<i32>} : memref<16x128xf32, #tpu.memory_space<vmem>>, vector<16x128xf32>,
    return
  }
  func.func @transform_0(%arg0: i32) -> (i32, i32) {
    %c0_i32 = arith.constant 0 : i32
    %c0_i32_0 = arith.constant 0 : i32
    return %arg0, %c0_i32 : i32, i32
  }
  func.func @transform_1(%arg0: i32) -> (i32, i32) {
    %c0_i32 = arith.constant 0 : i32
    %c0_i32_0 = arith.constant 0 : i32
    return %arg0, %c0_i32 : i32, i32
  }
  func.func @transform_2(%arg0: i32) -> (i32, i32) {
    %c0_i32 = arith.constant 0 : i32
    %c0_i32_0 = arith.constant 0 : i32
    return %arg0, %c0_i32 : i32, i32
  }
}

</mosaic_0001>

<llo_original>
// kernel: masked_softmax.1
$region0: #{masked_softmax.1}
  #allocation0 [shape = 'u32[]', space=smem, size = 0x4, offset = 0x4, fixed_abs, tag = 'smem constant byte address 0x4 - core index']
  #allocation1 [shape = 'u32[72,128]{1,0:T(1,128)}', space=vmem, size = 0x9000, scoped, tag = 'internal scratch']
  %s0 = inlined_call_operand.vmem [shape: f32[16,128], index: 0, kind: input, shape index: {}]
  %s1 = inlined_call_operand.vmem [shape: s32[16,128], index: 1, kind: input, shape index: {}]
  %s2 = inlined_call_operand.hbm [shape: f32[16,128], index: 2, kind: output, shape index: {}]
  %s3 = sld [smem:[#allocation0]]
  $region18: #{masked_softmax.1} parent=0
    _
  %s5 = ssub.s32 1, %s3
  %s6 = scalar_select 0, %s5, %s3
  $region1: #{masked_softmax.1} parent=0
    #allocation2 [shape = 'u8[8192]{0}', space=vmem, size = 0x2000, scoped, tag = 'output window, operand 0, single buffered']
    #allocation3 [shape = 's32[1]{0}', space=sflag, size = 0x4, scoped, tag = 'scoped memory for masked_softmax.1']
    %7 = vsyncpa [#allocation3], 0
    // Predicated region
    $region2: #{masked_softmax.1} parent=1 // pred_check
      _
    $region3: #{masked_softmax.1} parent=1 // pred_check_branch
      %9 = sbr.rel (0) target = $region5
    $region4: #{masked_softmax.1} parent=1 // pred_region
      _
    $region5: #{masked_softmax.1} parent=1 // pred_fallthru
      _
    // Predicated region
    $region6: #{masked_softmax.1} parent=1 // pred_check
      _
    $region7: #{masked_softmax.1} parent=1 // pred_check_branch
      %11 = sbr.rel (0) target = $region9
    $region8: #{masked_softmax.1} parent=1 // pred_region
      _
    $region9: #{masked_softmax.1} parent=1 // pred_fallthru
      _
    %v12 = vld [vmem:[%s0] sm:$0xff]
    %v13 = vld [vmem:[%s0 + $0x8] sm:$0xff]
    %v14 = vld [vmem:[%s1] sm:$0xff]
    %v15 = vld [vmem:[%s1 + $0x8] sm:$0xff]
    %vm16 = vcmp.ne.s32.totalorder %v14, 0
    %vm17 = vcmp.ne.s32.totalorder %v15, 0
    %v18 = vsel %vm16, %v12, -3.4028235e+38
    %v19 = vsel %vm17, %v13, -3.4028235e+38
    %20 = vmax.xlane.f32.xlu0 %v18
    %v21 = vpop.xlane.xlu0 %20
    %22 = vmax.xlane.f32.xlu0 %v19
    %v23 = vpop.xlane.xlu0 %22
    %v24 = vsub.f32 %v18, %v21
    %v25 = vsub.f32 %v19, %v23
    %v26 = vmul.f32 %v24, 1.442695
    %v27 = vpow.pop %v26
    %v28 = vmul.f32 %v25, 1.442695
    %v29 = vpow.pop %v28
    %30 = vadd.xlane.f32.xlu0 %v27
    %v31 = vpop.xlane.xlu0 %30
    %32 = vadd.xlane.f32.xlu0 %v29
    %v33 = vpop.xlane.xlu0 %32
    %v34 = vrcp.pop %v31
    %v35 = vrcp.pop %v33
    %v36 = vmul.f32 %v31, %v34
    %v37 = vmul.f32 %v33, %v35
    %v38 = vsub.f32 2.0, %v36
    %v39 = vsub.f32 2.0, %v37
    %v40 = vmul.f32 %v34, %v38
    %v41 = vmul.f32 %v35, %v39
    %v42 = vmul.f32 %v27, %v40
    %v43 = vmul.f32 %v29, %v41
    %44 = vst [vmem:[#allocation2] sm:$0xff] %v42
    %45 = vst [vmem:[#allocation2 + $0x8] sm:$0xff] %v43
    // Predicated region
    $region10: #{masked_softmax.1} parent=1 // pred_check
      _
    $region11: #{masked_softmax.1} parent=1 // pred_check_branch
      %47 = sbr.rel (0) target = $region13
    $region12: #{masked_softmax.1} parent=1 // pred_region
      %49 = vsyncadd [#allocation3], 0
      %s50 = sshll.u32 [#allocation2], 4
      %s51 = int_to_ptr.vmem [resolvable:$true] %s50
      %s52 = sshll.u32 %s2, 4
      %s53 = int_to_ptr.hbm [resolvable:$true] %s52
      %58 = dma.vmem_to_hbm [thread:$0]  %s51, 256, %s53, [#allocation3], 128, 128, 8
    $region13: #{masked_softmax.1} parent=1 // pred_fallthru
      _
    // Predicated region
    $region14: #{masked_softmax.1} parent=1 // pred_check
      _
    $region15: #{masked_softmax.1} parent=1 // pred_check_branch
      %60 = sbr.rel (0) target = $region17
    $region16: #{masked_softmax.1} parent=1 // pred_region
      %62 = dma.done [#allocation3], 256
    $region17: #{masked_softmax.1} parent=1 // pred_fallthru
      _
    %63 = vsyncpa [#allocation3], 1

</llo_original>
